<compile_context>
chip_gen: v7x
topology: tpu7x:2x2x1
jax: 0.10.0
libtpu: 0.0.40
codegen_flags: <defaults>
</compile_context>

<pallas_src>
import functools

import jax
import jax.numpy as jnp
import numpy as np
from jax.experimental import pallas as pl
from jax.experimental.pallas import tpu as pltpu


# ---------------------------------------------------------------------------
# Quantization helpers.  These reproduce UniformQuantize.forward with
# flatten_dims=None, reduce_dim=None, signed=False, stochastic=False,
# dequantize=True:  2-D tensors -> per-row min/max, 1-D tensors -> global.
# ---------------------------------------------------------------------------
def _rowwise_quant(x, num_bits, valid_cols=None, approx_recip=False):
    """Per-row (last-axis) min/max uniform quantize-dequantize.

    valid_cols: if set and smaller than the row width, only the first
    `valid_cols` columns participate in the min/max (used for lane-padded
    outputs; padded columns are sliced off later so their values are don't-care).
    approx_recip: use pl.reciprocal on the EUP (only valid inside a kernel).
    """
    qmax = 2.0 ** num_bits - 1.0
    if valid_cols is not None and valid_cols < x.shape[-1]:
        col = jax.lax.broadcasted_iota(jnp.int32, x.shape, x.ndim - 1)
        valid = col < valid_cols
        mn = jnp.min(jnp.where(valid, x, jnp.inf), axis=-1, keepdims=True)
        mx = jnp.max(jnp.where(valid, x, -jnp.inf), axis=-1, keepdims=True)
    else:
        mn = jnp.min(x, axis=-1, keepdims=True)
        mx = jnp.max(x, axis=-1, keepdims=True)
    scale = jnp.maximum((mx - mn) / qmax, 1e-8)
    if approx_recip:
        inv = pl.reciprocal(scale, approx=True)
    else:
        inv = 1.0 / scale
    q = jnp.round(jnp.clip((x - mn) * inv, 0.0, qmax))
    return q * scale + mn


def _global_quant(x, num_bits):
    """1-D tensor (bias): single global min/max quantize-dequantize."""
    qmax = 2.0 ** num_bits - 1.0
    mn = jnp.min(x)
    mx = jnp.max(x)
    scale = jnp.maximum((mx - mn) / qmax, 1e-8)
    q = jnp.round(jnp.clip((x - mn) / scale, 0.0, qmax))
    return q * scale + mn


def _round_up(x, m):
    return ((x + m - 1) // m) * m


def _choose_tile_m(n, a_elem_bytes=2, budget_bytes=12 << 20):
    """Biggest row tile whose double-buffered A slab fits a v7x-safe budget."""
    n128 = _round_up(n, 128)
    tm = 512
    while tm > 16 and 2 * tm * n128 * a_elem_bytes > budget_bytes:
        tm //= 2
    return max(16, min(tm, _round_up(n, 16)))


# ---------------------------------------------------------------------------
# Pallas kernels.
# ---------------------------------------------------------------------------
def _project_kernel(feat_ref, norm_l_ref, qw_ref, h_ref, *, num_bits):
    """Prologue (in_feats > out_feats branch), row-tiled over source nodes:
    h = rowwise_quant(feat * deg_out^{-1/2}) @ qweight  (out dim lane-padded)."""
    feat_src = feat_ref[...] * norm_l_ref[...]
    qfeat = _rowwise_quant(feat_src, num_bits, approx_recip=True)
    h_ref[...] = jnp.dot(qfeat, qw_ref[...], preferred_element_type=jnp.float32)


def _agg_proj_first_kernel(a_ref, h_ref, norm_r_ref, qb_ref, out_ref,
                           *, num_bits, out_real):
    """Main kernel (in_feats > out_feats): per destination-row tile,
    out = rowwise_quant((A_tile @ h) * deg_in^{-1/2}) + qbias."""
    a = a_ref[...].astype(jnp.float32)           # bf16 (lossless 0/1) -> f32
    agg = jnp.dot(a, h_ref[...], preferred_element_type=jnp.float32)
    qrst = agg * norm_r_ref[...]
    out_ref[...] = (_rowwise_quant(qrst, num_bits, valid_cols=out_real,
                                   approx_recip=True) + qb_ref[...])


def _agg_then_proj_kernel(a_ref, h_ref, qw_ref, norm_r_ref, qb_ref, out_ref,
                          *, num_bits, out_real):
    """Main kernel (in_feats <= out_feats): aggregate, quantize, project.
    out = rowwise_quant(rowwise_quant(A_tile @ feat_src) @ qW * deg_in^{-1/2}) + qbias."""
    a = a_ref[...].astype(jnp.float32)
    agg = jnp.dot(a, h_ref[...], preferred_element_type=jnp.float32)
    qagg = _rowwise_quant(agg, num_bits, approx_recip=True)
    qrst = jnp.dot(qagg, qw_ref[...], preferred_element_type=jnp.float32)
    qrst = qrst * norm_r_ref[...]
    out_ref[...] = (_rowwise_quant(qrst, num_bits, valid_cols=out_real,
                                   approx_recip=True) + qb_ref[...])


# ---------------------------------------------------------------------------
# Wrapper: hoists tile-invariant work, pads for lane density, builds the grid.
# ---------------------------------------------------------------------------
def qgraphconv_forward(adj, feat, weight, bias, num_bits=8, tile_m=None):
    """adj: (N, N) float dense adjacency A[dst, src]; feat: (N, in_feats);
    weight: (in_feats, out_feats); bias: (out_feats,)."""
    n = adj.shape[0]
    in_feats, out_feats = weight.shape

    adj = adj.astype(jnp.float32)
    feat = feat.astype(jnp.float32)
    weight = weight.astype(jnp.float32)
    bias = bias.astype(jnp.float32)

    # --- tile-invariant prologue (plain JAX, O(N^2) reduce + O(F^2) quant) ---
    deg_out = jnp.sum(adj, axis=0)[:, None]                 # out-degrees (col sums)
    deg_in = jnp.sum(adj, axis=1, keepdims=True)            # in-degrees  (row sums)
    norm_l = jax.lax.rsqrt(jnp.maximum(deg_out, 1.0))       # norm == 'both'
    norm_r = jax.lax.rsqrt(jnp.maximum(deg_in, 1.0))
    qweight = _rowwise_quant(weight, num_bits)              # per-row min/max
    qbias = _global_quant(bias, num_bits).reshape(1, out_feats)

    # --- padding / tiling ---------------------------------------------------
    if tile_m is None:
        tile_m = _choose_tile_m(n)
    tile_m = max(16, _round_up(int(tile_m), 16))            # bf16 sublane packing
    n_pad = _round_up(n, tile_m)
    out_pad = _round_up(out_feats, 128)                     # lane-dense output

    adj_p = jnp.pad(adj.astype(jnp.bfloat16),               # bf16 is exact for 0/1
                    ((0, n_pad - n), (0, n_pad - n)))
    feat_p = jnp.pad(feat, ((0, n_pad - n), (0, 0)))
    norm_l_p = jnp.pad(norm_l, ((0, n_pad - n), (0, 0)), constant_values=1.0)
    norm_r_p = jnp.pad(norm_r, ((0, n_pad - n), (0, 0)), constant_values=1.0)
    qw_pad = jnp.pad(qweight, ((0, 0), (0, out_pad - out_feats)))
    qb_pad = jnp.pad(qbias, ((0, 0), (0, out_pad - out_feats)))

    grid = (n_pad // tile_m,)
    proj_first = in_feats > out_feats

    if proj_first:
        # One-shot projection prologue (does not depend on the dst row tile).
        h = pl.pallas_call(
            functools.partial(_project_kernel, num_bits=num_bits),
            out_shape=jax.ShapeDtypeStruct((n_pad, out_pad), jnp.float32),
            grid_spec=pl.GridSpec(
                grid=grid,
                in_specs=[
                    pl.BlockSpec((tile_m, in_feats), lambda i: (i, 0)),
                    pl.BlockSpec((tile_m, 1), lambda i: (i, 0)),
                    pl.BlockSpec((in_feats, out_pad), lambda i: (0, 0)),
                ],
                out_specs=pl.BlockSpec((tile_m, out_pad), lambda i: (i, 0)),
            ),
            compiler_params=pltpu.CompilerParams(
                dimension_semantics=("parallel",)),
        )(feat_p, norm_l_p, qw_pad)
        f_h = out_pad
        kernel = functools.partial(_agg_proj_first_kernel,
                                   num_bits=num_bits, out_real=out_feats)
        inputs = (adj_p, h, norm_r_p, qb_pad)
        in_specs = [
            pl.BlockSpec((tile_m, n_pad), lambda i: (i, 0)),    # A row slab (bf16)
            pl.BlockSpec((n_pad, out_pad), lambda i: (0, 0)),   # h resident
            pl.BlockSpec((tile_m, 1), lambda i: (i, 0)),
            pl.BlockSpec((1, out_pad), lambda i: (0, 0)),
        ]
    else:
        # Aggregate-first branch: source features just get the left norm.
        h = feat_p * norm_l_p                                    # (n_pad, in_feats)
        f_h = in_feats
        kernel = functools.partial(_agg_then_proj_kernel,
                                   num_bits=num_bits, out_real=out_feats)
        inputs = (adj_p, h, qw_pad, norm_r_p, qb_pad)
        in_specs = [
            pl.BlockSpec((tile_m, n_pad), lambda i: (i, 0)),
            pl.BlockSpec((n_pad, in_feats), lambda i: (0, 0)),
            pl.BlockSpec((in_feats, out_pad), lambda i: (0, 0)),
            pl.BlockSpec((tile_m, 1), lambda i: (i, 0)),
            pl.BlockSpec((1, out_pad), lambda i: (0, 0)),
        ]

    # VMEM estimate: double-buffered bf16 A slab + resident h + out tiles.
    vmem_need = (2 * tile_m * n_pad * 2 + n_pad * f_h * 4
                 + 2 * tile_m * out_pad * 4 + (4 << 20))
    vmem_limit = None
    if vmem_need > (32 << 20):
        vmem_limit = min(int(vmem_need), 48 << 20)   # stay v7x-safe (64 MiB part)

    out = pl.pallas_call(
        kernel,
        out_shape=jax.ShapeDtypeStruct((n_pad, out_pad), jnp.float32),
        grid_spec=pl.GridSpec(
            grid=grid,
            in_specs=in_specs,
            out_specs=pl.BlockSpec((tile_m, out_pad), lambda i: (i, 0)),
        ),
        compiler_params=pltpu.CompilerParams(
            dimension_semantics=("parallel",),
            vmem_limit_bytes=vmem_limit),
    )(*inputs)

    # activation is None in this configuration; quantize_grad is identity fwd.
    return out[:n, :out_feats]


# ---------------------------------------------------------------------------
# Pure-JAX reference (same math, unpadded, exact division) for a sanity check.
# ---------------------------------------------------------------------------
def qgraphconv_reference(adj, feat, weight, bias, num_bits=8):
    adj = adj.astype(jnp.float32)
    deg_out = jnp.sum(adj, axis=0)[:, None]
    deg_in = jnp.sum(adj, axis=1, keepdims=True)
    feat_src = feat * jax.lax.rsqrt(jnp.maximum(deg_out, 1.0))
    qweight = _rowwise_quant(weight, num_bits)
    if weight.shape[0] > weight.shape[1]:
        rst = adj @ (_rowwise_quant(feat_src, num_bits) @ qweight)
    else:
        rst = _rowwise_quant(adj @ feat_src, num_bits) @ qweight
    rst = rst * jax.lax.rsqrt(jnp.maximum(deg_in, 1.0))
    qbias = _global_quant(bias, num_bits)
    return _rowwise_quant(rst, num_bits) + qbias[None, :]


if __name__ == "__main__":
    key = jax.random.PRNGKey(0)
    NUM_BITS = 8
    N = 200            # not a multiple of the tile -> exercises padding/masking
    TILE_M = 64        # small test tile; grid = 256 // 64 = 4 steps

    # Two configs to hit both branches of the module.
    configs = [
        ("in_feats > out_feats", 48, 16),
        ("in_feats <= out_feats", 16, 48),
    ]

    for name, in_f, out_f in configs:
        key, k_adj, k_feat, k_w, k_b = jax.random.split(key, 5)

        # Random sparse-ish graph with self-loops (no zero in-degree nodes,
        # matching the module's allow_zero_in_degree check).
        adj = (jax.random.uniform(k_adj, (N, N)) < 0.1).astype(jnp.float32)
        adj = jnp.maximum(adj, jnp.eye(N, dtype=jnp.float32))

        feat = jax.random.normal(k_feat, (N, in_f), dtype=jnp.float32)

        # xavier_uniform-style weight; small random bias to exercise bias quant.
        bound = float(np.sqrt(6.0 / (in_f + out_f)))
        weight = jax.random.uniform(k_w, (in_f, out_f), minval=-bound,
                                    maxval=bound, dtype=jnp.float32)
        bias = 0.1 * jax.random.normal(k_b, (out_f,), dtype=jnp.float32)

        out = jax.block_until_ready(
            qgraphconv_forward(adj, feat, weight, bias,
                               num_bits=NUM_BITS, tile_m=TILE_M))
        ref = jax.block_until_ready(
            qgraphconv_reference(adj, feat, weight, bias, num_bits=NUM_BITS))

        out_np = np.asarray(out)
        ref_np = np.asarray(ref)
        assert out_np.shape == (N, out_f), (name, out_np.shape)

        # Tolerance: MXU vs XLA reduction order and the approximate EUP
        # reciprocal in the quantizer can shift values sitting on a rounding
        # boundary by one quantization step; bound that step by the global
        # output range / (2^bits - 1).
        qstep = float(ref_np.max() - ref_np.min()) / (2.0 ** NUM_BITS - 1.0)
        np.testing.assert_allclose(out_np, ref_np, rtol=3e-2,
                                   atol=3.0 * qstep + 1e-3)

    print("KERNEL_OK")
</pallas_src>

<mosaic_0001>
module attributes {stable_mosaic.version = 11 : i64} {
  func.func @_project_kernel(%arg0: i32, %arg1: memref<64x48xf32, #tpu.memory_space<vmem>>, %arg2: memref<64x1xf32, #tpu.memory_space<vmem>>, %arg3: memref<48x128xf32, #tpu.memory_space<vmem>>, %arg4: memref<64x128xf32, #tpu.memory_space<vmem>>) attributes {dimension_semantics = [#tpu.dimension_semantics<parallel>], iteration_bounds = array<i64: 4>, scalar_prefetch = 0 : i64, scratch_operands = 0 : i64, tpu.core_type = #tpu.core_type<tc>, window_params = [{transform_indices = @transform_0, window_bounds = array<i64: 64, 48>}, {transform_indices = @transform_1, window_bounds = array<i64: 64, 1>}, {pipeline_mode = #tpu.pipeline_mode<synchronous>, transform_indices = @transform_2, window_bounds = array<i64: 48, 128>}, {transform_indices = @transform_3, window_bounds = array<i64: 64, 128>}]} {
    %c0 = arith.constant 0 : index
    %c0_0 = arith.constant 0 : index
    %0 = vector.load %arg1[%c0, %c0_0] : memref<64x48xf32, #tpu.memory_space<vmem>>, vector<64x48xf32>
    %c0_1 = arith.constant 0 : index
    %c0_2 = arith.constant 0 : index
    %1 = vector.load %arg2[%c0_1, %c0_2] : memref<64x1xf32, #tpu.memory_space<vmem>>, vector<64x1xf32>
    %2 = vector.broadcast %1 : vector<64x1xf32> to vector<64x48xf32>
    %3 = arith.mulf %0, %2 : vector<64x48xf32>
    %cst = arith.constant dense<0x7F800000> : vector<64xf32>
    %4 = vector.multi_reduction <minimumf>, %3, %cst [1] : vector<64x48xf32> to vector<64xf32>
    %5 = vector.shape_cast %4 : vector<64xf32> to vector<64x1xf32>
    %cst_3 = arith.constant dense<0xFF800000> : vector<64xf32>
    %6 = vector.multi_reduction <maximumf>, %3, %cst_3 [1] : vector<64x48xf32> to vector<64xf32>
    %7 = vector.shape_cast %6 : vector<64xf32> to vector<64x1xf32>
    %8 = arith.subf %7, %5 : vector<64x1xf32>
    %cst_4 = arith.constant 2.550000e+02 : f32
    %9 = vector.broadcast %cst_4 : f32 to vector<64x1xf32>
    %10 = arith.divf %8, %9 : vector<64x1xf32>
    %cst_5 = arith.constant 9.99999993E-9 : f32
    %11 = vector.broadcast %cst_5 : f32 to vector<64x1xf32>
    %12 = arith.maximumf %10, %11 : vector<64x1xf32>
    %13 = tpu.reciprocal %12 {approx = true} : vector<64x1xf32> -> vector<64x1xf32>
    %14 = vector.broadcast %5 : vector<64x1xf32> to vector<64x48xf32>
    %15 = arith.subf %3, %14 : vector<64x48xf32>
    %16 = vector.broadcast %13 : vector<64x1xf32> to vector<64x48xf32>
    %17 = arith.mulf %15, %16 : vector<64x48xf32>
    %cst_6 = arith.constant 0.000000e+00 : f32
    %cst_7 = arith.constant 2.550000e+02 : f32
    %18 = vector.broadcast %cst_6 : f32 to vector<64x48xf32>
    %19 = arith.maximumf %18, %17 : vector<64x48xf32>
    %20 = vector.broadcast %cst_7 : f32 to vector<64x48xf32>
    %21 = arith.minimumf %20, %19 : vector<64x48xf32>
    %22 = math.roundeven %21 : vector<64x48xf32>
    %23 = vector.broadcast %12 : vector<64x1xf32> to vector<64x48xf32>
    %24 = arith.mulf %22, %23 : vector<64x48xf32>
    %25 = vector.broadcast %5 : vector<64x1xf32> to vector<64x48xf32>
    %26 = arith.addf %24, %25 : vector<64x48xf32>
    %c0_8 = arith.constant 0 : index
    %c0_9 = arith.constant 0 : index
    %27 = vector.load %arg3[%c0_8, %c0_9] : memref<48x128xf32, #tpu.memory_space<vmem>>, vector<48x128xf32>
    %cst_10 = arith.constant dense<0.000000e+00> : vector<64x128xf32>
    %28 = tpu.matmul %26, %27, %cst_10 {dimension_numbers = #tpu.dot_dimension_numbers<[1], [0], [0], [1], [0, 0, 1, 1], [], []>} : vector<64x48xf32>, vector<48x128xf32>, vector<64x128xf32> -> vector<64x128xf32>
    %c0_11 = arith.constant 0 : index
    %c0_12 = arith.constant 0 : index
    %29 = vector.load %arg4[%c0_11, %c0_12] : memref<64x128xf32, #tpu.memory_space<vmem>>, vector<64x128xf32>
    tpu.vector_store %arg4[%c0_11, %c0_12], %28 {strides = array<i32>} : memref<64x128xf32, #tpu.memory_space<vmem>>, vector<64x128xf32>,
    return
  }
  func.func @transform_0(%arg0: i32) -> (i32, i32) {
    %c0_i32 = arith.constant 0 : i32
    %c0_i32_0 = arith.constant 0 : i32
    return %arg0, %c0_i32 : i32, i32
  }
  func.func @transform_1(%arg0: i32) -> (i32, i32) {
    %c0_i32 = arith.constant 0 : i32
    %c0_i32_0 = arith.constant 0 : i32
    return %arg0, %c0_i32 : i32, i32
  }
  func.func @transform_2(%arg0: i32) -> (i32, i32) {
    %c0_i32 = arith.constant 0 : i32
    %c0_i32_0 = arith.constant 0 : i32
    %c0_i32_1 = arith.constant 0 : i32
    return %c0_i32, %c0_i32_0 : i32, i32
  }
  func.func @transform_3(%arg0: i32) -> (i32, i32) {
    %c0_i32 = arith.constant 0 : i32
    %c0_i32_0 = arith.constant 0 : i32
    return %arg0, %c0_i32 : i32, i32
  }
}

</mosaic_0001>

<llo_original>
// kernel: tpu_custom_call.1
$region0: #{tpu_custom_call.1}
  #allocation0 [shape = 'u32[]', space=smem, size = 0x4, offset = 0x4, fixed_abs, tag = 'smem constant byte address 0x4 - core index']
  #allocation1 [shape = 'u32[144,128]{1,0:T(1,128)}', space=vmem, size = 0x12000, scoped, tag = 'internal scratch']
  %s0 = inlined_call_operand.vmem [shape: f32[256,48], index: 0, kind: input, shape index: {}]
  %s1 = inlined_call_operand.vmem [shape: f32[256,1], index: 1, kind: input, shape index: {}]
  %s2 = inlined_call_operand.vmem [shape: f32[48,128], index: 2, kind: input, shape index: {}]
  %s3 = inlined_call_operand.hbm [shape: f32[256,128], index: 3, kind: output, shape index: {}]
  %s4 = sld [smem:[#allocation0]]
  $region45: #{tpu_custom_call.1} parent=0
    _
  %s6 = ssub.s32 1, %s4
  %s7 = scalar_select 0, %s6, %s4
  $region1: #{tpu_custom_call.1} parent=0
    #allocation2 [shape = 'u8[65536]{0}', space=vmem, size = 0x10000, scoped, tag = 'output window, operand 0']
    #allocation3 [shape = 's32[2]{0}', space=sflag, size = 0x8, scoped, tag = 'scoped memory for tpu_custom_call.1']
    %8 = vsyncpa [#allocation3], 0
    %s9 = scalar_lea.sflag [#allocation3], 1
    %10 = vsyncpa %s9, 0
    loop: start=0, step=1, limit=6
    $region2: #{tpu_custom_call.1} parent=1 // loop_pre_header
      _
    $region3: #{tpu_custom_call.1} parent=1 // loop_header
      %s12 = sphi 0, %s16
      %p13 = scmp.ge.s32.totalorder %s12, 6
      %s22 = sphi 0, %s24
      %s25 = sphi 0, %s22
      %s26 = sphi 0, %s25
      %s42 = sphi 0, %s26
      %s48 = sphi 0, %s50
      %s51 = sphi 0, %s48
      %s52 = sphi 0, %s51
      %s68 = sphi 0, %s52
      %s72 = sphi 0, %s72
      %s74 = sphi 0, %s72
      %s75 = sphi 0, %s74
      %s89 = sphi 0, %s75
      %s95 = sphi 0, %s97
      %s98 = sphi 0, %s95
      %s99 = sphi 0, %s98
      %s115 = sphi 0, %s99
    $region4: #{tpu_custom_call.1} parent=1 // loop_header_branch
      %15 = sbr.rel (%p13) target = $region8
    $region5: #{tpu_custom_call.1} parent=1 // loop_body
      %s17 = ssub.s32 %s12, 1
      %s18 = ssub.s32 %s12, 2
      %s19 = sadd.s32 %s12, 1
      %s20 = ssub.s32 %s12, %s19
      %p21 = scmp.eq.s32.totalorder %s20, 0
      %s23 = sadd.s32 %s22, 1
      %s24 = scalar_select %p21, %s22, %s23
      %p27 = pneg %p21
      %p28 = scmp.eq.s32.totalorder %s12, 3
      %p29 = por %p27, %p28
      %p30 = scmp.ne.s32.totalorder %s22, %s25
      %p31 = scmp.eq.s32.totalorder %s12, 0
      %p32 = por %p30, %p31
      %p33 = scmp.ne.s32.totalorder %s22, %s25
      %p34 = scmp.eq.s32.totalorder %s17, 3
      %p35 = por %p33, %p34
      %p36 = scmp.ne.s32.totalorder %s25, %s26
      %p37 = scmp.eq.s32.totalorder %s17, 0
      %p38 = por %p36, %p37
      %p39 = scmp.ne.s32.totalorder %s25, %s26
      %p40 = scmp.eq.s32.totalorder %s18, 3
      %p41 = por %p39, %p40
      %p43 = scmp.ne.s32.totalorder %s26, %s42
      %p44 = scmp.eq.s32.totalorder %s18, 0
      %p45 = por %p43, %p44
      %s46 = ssub.s32 %s12, %s19
      %p47 = scmp.eq.s32.totalorder %s46, 0
      %s49 = sadd.s32 %s48, 1
      %s50 = scalar_select %p47, %s48, %s49
      %p53 = pneg %p47
      %p54 = scmp.eq.s32.totalorder %s12, 3
      %p55 = por %p53, %p54
      %p56 = scmp.ne.s32.totalorder %s48, %s51
      %p57 = scmp.eq.s32.totalorder %s12, 0
      %p58 = por %p56, %p57
      %p59 = scmp.ne.s32.totalorder %s48, %s51
      %p60 = scmp.eq.s32.totalorder %s17, 3
      %p61 = por %p59, %p60
      %p62 = scmp.ne.s32.totalorder %s51, %s52
      %p63 = scmp.eq.s32.totalorder %s17, 0
      %p64 = por %p62, %p63
      %p65 = scmp.ne.s32.totalorder %s51, %s52
      %p66 = scmp.eq.s32.totalorder %s18, 3
      %p67 = por %p65, %p66
      %p69 = scmp.ne.s32.totalorder %s52, %s68
      %p70 = scmp.eq.s32.totalorder %s18, 0
      %p71 = por %p69, %p70
      %s73 = sadd.s32 %s72, 1
      %p76 = scmp.eq.s32.totalorder %s12, 3
      %p77 = scmp.ne.s32.totalorder %s72, %s74
      %p78 = scmp.eq.s32.totalorder %s12, 0
      %p79 = por %p77, %p78
      %p80 = scmp.ne.s32.totalorder %s72, %s74
      %p81 = scmp.eq.s32.totalorder %s17, 3
      %p82 = por %p80, %p81
      %p83 = scmp.ne.s32.totalorder %s74, %s75
      %p84 = scmp.eq.s32.totalorder %s17, 0
      %p85 = por %p83, %p84
      %p86 = scmp.ne.s32.totalorder %s74, %s75
      %p87 = scmp.eq.s32.totalorder %s18, 3
      %p88 = por %p86, %p87
      %p90 = scmp.ne.s32.totalorder %s75, %s89
      %p91 = scmp.eq.s32.totalorder %s18, 0
      %p92 = por %p90, %p91
      %s93 = ssub.s32 %s12, %s19
      %p94 = scmp.eq.s32.totalorder %s93, 0
      %s96 = sadd.s32 %s95, 1
      %s97 = scalar_select %p94, %s95, %s96
      %p100 = pneg %p94
      %p101 = scmp.eq.s32.totalorder %s12, 3
      %p102 = por %p100, %p101
      %p103 = scmp.ne.s32.totalorder %s95, %s98
      %p104 = scmp.eq.s32.totalorder %s12, 0
      %p105 = por %p103, %p104
      %p106 = scmp.ne.s32.totalorder %s95, %s98
      %p107 = scmp.eq.s32.totalorder %s17, 3
      %p108 = por %p106, %p107
      %p109 = scmp.ne.s32.totalorder %s98, %s99
      %p110 = scmp.eq.s32.totalorder %s17, 0
      %p111 = por %p109, %p110
      %p112 = scmp.ne.s32.totalorder %s98, %s99
      %p113 = scmp.eq.s32.totalorder %s18, 3
      %p114 = por %p112, %p113
      %p116 = scmp.ne.s32.totalorder %s99, %s115
      %p117 = scmp.eq.s32.totalorder %s18, 0
      %p118 = por %p116, %p117
      %p119 = scmp.le.s32.totalorder 1, %s12
      %p120 = scmp.lt.s32.totalorder %s12, 5
      %p121 = pnand %p119, %p120
      %p122 = pneg %p121
      // Predicated region
      $region9: #{tpu_custom_call.1} parent=5 // pred_check
        _
      $region10: #{tpu_custom_call.1} parent=5 // pred_check_branch
        %124 = sbr.rel (%p121) target = $region12
      $region11: #{tpu_custom_call.1} parent=5 // pred_region
        %s125 = ssub.s32 %s12, 1
        // Predicated region
        $region13: #{tpu_custom_call.1} parent=11 // pred_check
          %p126 = pneg %p85
        $region14: #{tpu_custom_call.1} parent=11 // pred_check_branch
          %128 = sbr.rel (%p126) target = $region16
        $region15: #{tpu_custom_call.1} parent=11 // pred_region
          _
        $region16: #{tpu_custom_call.1} parent=11 // pred_fallthru
          _
      $region12: #{tpu_custom_call.1} parent=5 // pred_fallthru
        _
      %p129 = scmp.lt.s32.totalorder %s12, 4
      // Predicated region
      $region17: #{tpu_custom_call.1} parent=5 // pred_check
        %p130 = pneg %p129
      $region18: #{tpu_custom_call.1} parent=5 // pred_check_branch
        %132 = sbr.rel (%p130) target = $region20
      $region19: #{tpu_custom_call.1} parent=5 // pred_region
        // Predicated region
        $region21: #{tpu_custom_call.1} parent=19 // pred_check
          %p133 = pneg %p32
        $region22: #{tpu_custom_call.1} parent=19 // pred_check_branch
          %135 = sbr.rel (%p133) target = $region24
        $region23: #{tpu_custom_call.1} parent=19 // pred_region
          %s136 = smul.u32 8, %s12
          %p137 = scmp.lt.s32.totalorder %s136, 31
          %s138 = scalar_select %p137, %s136, 31
          %s139 = smul.addr %s138, 8
          %s140 = scalar_lea.vmem %s0, %s139
          %s141 = smul.u32 8, %s12
        $region24: #{tpu_custom_call.1} parent=19 // pred_fallthru
          _
        // Predicated region
        $region25: #{tpu_custom_call.1} parent=19 // pred_check
          %p142 = pneg %p58
        $region26: #{tpu_custom_call.1} parent=19 // pred_check_branch
          %144 = sbr.rel (%p142) target = $region28
        $region27: #{tpu_custom_call.1} parent=19 // pred_region
          %s145 = smul.u32 8, %s12
          %p146 = scmp.lt.s32.totalorder %s145, 31
          %s147 = scalar_select %p146, %s145, 31
          %s148 = smul.addr %s147, 8
          %s149 = scalar_lea.vmem %s1, %s148
          %s150 = smul.u32 8, %s12
        $region28: #{tpu_custom_call.1} parent=19 // pred_fallthru
          _
      $region20: #{tpu_custom_call.1} parent=5 // pred_fallthru
        _
      %p151 = scmp.le.s32.totalorder 1, %s12
      %p152 = scmp.lt.s32.totalorder %s12, 5
      %p153 = pnand %p151, %p152
      %p154 = pneg %p153
      // Predicated region
      $region29: #{tpu_custom_call.1} parent=5 // pred_check
        _
      $region30: #{tpu_custom_call.1} parent=5 // pred_check_branch
        %156 = sbr.rel (%p153) target = $region32
      $region31: #{tpu_custom_call.1} parent=5 // pred_region
        %s157 = ssub.s32 %s12, 1
        %s158 = smul.u32 8, %s17
        %p159 = scmp.lt.s32.totalorder %s158, 31
        %s160 = scalar_select %p159, %s158, 31
        %s161 = smul.addr %s160, 8
        %s162 = scalar_lea.vmem %s0, %s161
        %p163 = pneg %p38
        %p164 = pneg %p35
        %s165 = smul.u32 8, %s17
        %p166 = scmp.lt.s32.totalorder %s165, 31
        %s167 = scalar_select %p166, %s165, 31
        %s168 = smul.addr %s167, 8
        %s169 = scalar_lea.vmem %s1, %s168
        %p170 = pneg %p64
        %p171 = pneg %p61
        %p172 = pneg %p85
        %p173 = pneg %p82
        %p174 = pneg %p111
        %p175 = pneg %p108
        %s176 = sand.u32 %s98, 1
        %s177 = scalar_lea.sflag [#allocation3], %s176
        %s178 = sand.u32 %s98, 1
        %s179 = smul.addr %s178, 64
        %s180 = scalar_lea.vmem [#allocation2], %s179
        %s181 = smul.u32 8, %s17
        %p182 = scmp.lt.s32.totalorder %s181, 31
        %s183 = scalar_select %p182, %s181, 31
        %s184 = smul.addr %s183, 8
        %s185 = scalar_lea.vmem %s0, %s184
        %s186 = smul.u32 8, %s17
        %s187 = smul.u32 8, %s17
        %p188 = scmp.lt.s32.totalorder %s187, 31
        %s189 = scalar_select %p188, %s187, 31
        %s190 = smul.addr %s189, 8
        %s191 = scalar_lea.vmem %s1, %s190
        %s192 = smul.u32 8, %s17
        %s193 = smul.u32 8, %s17
        %v194 = vld [vmem:[%s185] sm:$0xff]
        %v195 = vld [vmem:[%s185 + $0x8] sm:$0xff]
        %v196 = vld [vmem:[%s185 + $0x10] sm:$0xff]
        %v197 = vld [vmem:[%s185 + $0x18] sm:$0xff]
        %v198 = vld [vmem:[%s185 + $0x20] sm:$0xff]
        %v199 = vld [vmem:[%s185 + $0x28] sm:$0xff]
        %v200 = vld [vmem:[%s185 + $0x30] sm:$0xff]
        %v201 = vld [vmem:[%s185 + $0x38] sm:$0xff]
        %v202 = vld [vmem:[%s191] sm:$0xff]
        %v203 = vld [vmem:[%s191 + $0x8] sm:$0xff]
        %v204 = vld [vmem:[%s191 + $0x10] sm:$0xff]
        %v205 = vld [vmem:[%s191 + $0x18] sm:$0xff]
        %v206 = vld [vmem:[%s191 + $0x20] sm:$0xff]
        %v207 = vld [vmem:[%s191 + $0x28] sm:$0xff]
        %v208 = vld [vmem:[%s191 + $0x30] sm:$0xff]
        %v209 = vld [vmem:[%s191 + $0x38] sm:$0xff]
        %211 = vset.pattern.permute.xlu0 0
        %212 = vperm.xlu0 %211, %v202
        %v213 = vpop.permute.xlu0 %212
        %216 = vset.pattern.permute.xlu0 0
        %217 = vperm.xlu0 %216, %v203
        %v218 = vpop.permute.xlu0 %217
        %221 = vset.pattern.permute.xlu0 0
        %222 = vperm.xlu0 %221, %v204
        %v223 = vpop.permute.xlu0 %222
        %226 = vset.pattern.permute.xlu0 0
        %227 = vperm.xlu0 %226, %v205
        %v228 = vpop.permute.xlu0 %227
        %231 = vset.pattern.permute.xlu0 0
        %232 = vperm.xlu0 %231, %v206
        %v233 = vpop.permute.xlu0 %232
        %236 = vset.pattern.permute.xlu0 0
        %237 = vperm.xlu0 %236, %v207
        %v238 = vpop.permute.xlu0 %237
        %241 = vset.pattern.permute.xlu0 0
        %242 = vperm.xlu0 %241, %v208
        %v243 = vpop.permute.xlu0 %242
        %246 = vset.pattern.permute.xlu0 0
        %247 = vperm.xlu0 %246, %v209
        %v248 = vpop.permute.xlu0 %247
        %v250 = vmul.f32 %v194, %v213
        %v251 = vmul.f32 %v195, %v218
        %v252 = vmul.f32 %v196, %v223
        %v253 = vmul.f32 %v197, %v228
        %v254 = vmul.f32 %v198, %v233
        %v255 = vmul.f32 %v199, %v238
        %v256 = vmul.f32 %v200, %v243
        %v257 = vmul.f32 %v201, %v248
        %vm258 = vcmask 392192
        %v259 = vsel %vm258, %v250, inf
        %260 = vmin.xlane.f32.xlu0 %v259
        %v261 = vpop.xlane.xlu0 %260
        %v262 = vsel %vm258, %v251, inf
        %263 = vmin.xlane.f32.xlu0 %v262
        %v264 = vpop.xlane.xlu0 %263
        %v265 = vsel %vm258, %v252, inf
        %266 = vmin.xlane.f32.xlu0 %v265
        %v267 = vpop.xlane.xlu0 %266
        %v268 = vsel %vm258, %v253, inf
        %269 = vmin.xlane.f32.xlu0 %v268
        %v270 = vpop.xlane.xlu0 %269
        %v271 = vsel %vm258, %v254, inf
        %272 = vmin.xlane.f32.xlu0 %v271
        %v273 = vpop.xlane.xlu0 %272
        %v274 = vsel %vm258, %v255, inf
        %275 = vmin.xlane.f32.xlu0 %v274
        %v276 = vpop.xlane.xlu0 %275
        %v277 = vsel %vm258, %v256, inf
        %278 = vmin.xlane.f32.xlu0 %v277
        %v279 = vpop.xlane.xlu0 %278
        %v280 = vsel %vm258, %v257, inf
        %281 = vmin.xlane.f32.xlu0 %v280
        %v282 = vpop.xlane.xlu0 %281
        %v283 = vsel %vm258, %v250, -inf
        %284 = vmax.xlane.f32.xlu0 %v283
        %v285 = vpop.xlane.xlu0 %284
        %v286 = vsel %vm258, %v251, -inf
        %287 = vmax.xlane.f32.xlu0 %v286
        %v288 = vpop.xlane.xlu0 %287
        %v289 = vsel %vm258, %v252, -inf
        %290 = vmax.xlane.f32.xlu0 %v289
        %v291 = vpop.xlane.xlu0 %290
        %v292 = vsel %vm258, %v253, -inf
        %293 = vmax.xlane.f32.xlu0 %v292
        %v294 = vpop.xlane.xlu0 %293
        %v295 = vsel %vm258, %v254, -inf
        %296 = vmax.xlane.f32.xlu0 %v295
        %v297 = vpop.xlane.xlu0 %296
        %v298 = vsel %vm258, %v255, -inf
        %299 = vmax.xlane.f32.xlu0 %v298
        %v300 = vpop.xlane.xlu0 %299
        %v301 = vsel %vm258, %v256, -inf
        %302 = vmax.xlane.f32.xlu0 %v301
        %v303 = vpop.xlane.xlu0 %302
        %v304 = vsel %vm258, %v257, -inf
        %305 = vmax.xlane.f32.xlu0 %v304
        %v306 = vpop.xlane.xlu0 %305
        %v307 = vsub.f32 %v285, %v261
        %v308 = vsub.f32 %v288, %v264
        %v309 = vsub.f32 %v291, %v267
        %v310 = vsub.f32 %v294, %v270
        %v311 = vsub.f32 %v297, %v273
        %v312 = vsub.f32 %v300, %v276
        %v313 = vsub.f32 %v303, %v279
        %v314 = vsub.f32 %v306, %v282
        %v315 = vrcp.pop 255.0
        %v316 = vmul.f32 %v307, %v315
        %v317 = vmul.f32 %v308, %v315
        %v318 = vmul.f32 %v309, %v315
        %v319 = vmul.f32 %v310, %v315
        %v320 = vmul.f32 %v311, %v315
        %v321 = vmul.f32 %v312, %v315
        %v322 = vmul.f32 %v313, %v315
        %v323 = vmul.f32 %v314, %v315
        %v324 = vmax.f32 %v316, 1e-08
        %v325 = vmax.f32 %v317, 1e-08
        %v326 = vmax.f32 %v318, 1e-08
        %v327 = vmax.f32 %v319, 1e-08
        %v328 = vmax.f32 %v320, 1e-08
        %v329 = vmax.f32 %v321, 1e-08
        %v330 = vmax.f32 %v322, 1e-08
        %v331 = vmax.f32 %v323, 1e-08
        %v332 = vrcp.pop %v324
        %v333 = vrcp.pop %v325
        %v334 = vrcp.pop %v326
        %v335 = vrcp.pop %v327
        %v336 = vrcp.pop %v328
        %v337 = vrcp.pop %v329
        %v338 = vrcp.pop %v330
        %v339 = vrcp.pop %v331
        %v340 = vsub.f32 %v250, %v261
        %v341 = vsub.f32 %v251, %v264
        %v342 = vsub.f32 %v252, %v267
        %v343 = vsub.f32 %v253, %v270
        %v344 = vsub.f32 %v254, %v273
        %v345 = vsub.f32 %v255, %v276
        %v346 = vsub.f32 %v256, %v279
        %v347 = vsub.f32 %v257, %v282
        %v348 = vmul.f32 %v340, %v332
        %v349 = vmul.f32 %v341, %v333
        %v350 = vmul.f32 %v342, %v334
        %v351 = vmul.f32 %v343, %v335
        %v352 = vmul.f32 %v344, %v336
        %v353 = vmul.f32 %v345, %v337
        %v354 = vmul.f32 %v346, %v338
        %v355 = vmul.f32 %v347, %v339
        %v356 = vmax.f32 %v348, 0.0
        %v357 = vmax.f32 %v349, 0.0
        %v358 = vmax.f32 %v350, 0.0
        %v359 = vmax.f32 %v351, 0.0
        %v360 = vmax.f32 %v352, 0.0
        %v361 = vmax.f32 %v353, 0.0
        %v362 = vmax.f32 %v354, 0.0
        %v363 = vmax.f32 %v355, 0.0
        %v364 = vmin.f32 %v356, 255.0
        %v365 = vmin.f32 %v357, 255.0
        %v366 = vmin.f32 %v358, 255.0
        %v367 = vmin.f32 %v359, 255.0
        %v368 = vmin.f32 %v360, 255.0
        %v369 = vmin.f32 %v361, 255.0
        %v370 = vmin.f32 %v362, 255.0
        %v371 = vmin.f32 %v363, 255.0
        %v372 = vround.ne.pseudo %v364
        %v373 = vround.ne.pseudo %v365
        %v374 = vround.ne.pseudo %v366
        %v375 = vround.ne.pseudo %v367
        %v376 = vround.ne.pseudo %v368
        %v377 = vround.ne.pseudo %v369
        %v378 = vround.ne.pseudo %v370
        %v379 = vround.ne.pseudo %v371
        %v380 = vmul.f32 %v372, %v324
        %v381 = vmul.f32 %v373, %v325
        %v382 = vmul.f32 %v374, %v326
        %v383 = vmul.f32 %v375, %v327
        %v384 = vmul.f32 %v376, %v328
        %v385 = vmul.f32 %v377, %v329
        %v386 = vmul.f32 %v378, %v330
        %v387 = vmul.f32 %v379, %v331
        %v388 = vadd.f32 %v380, %v261
        %v389 = vadd.f32 %v381, %v264
        %v390 = vadd.f32 %v382, %v267
        %v391 = vadd.f32 %v383, %v270
        %v392 = vadd.f32 %v384, %v273
        %v393 = vadd.f32 %v385, %v276
        %v394 = vadd.f32 %v386, %v279
        %v395 = vadd.f32 %v387, %v282
        %v396 = vld [vmem:[%s2] sm:$0xff]
        %v397 = vld [vmem:[%s2 + $0x8] sm:$0xff]
        %v398 = vld [vmem:[%s2 + $0x10] sm:$0xff]
        %v399 = vld [vmem:[%s2 + $0x18] sm:$0xff]
        %v400 = vld [vmem:[%s2 + $0x20] sm:$0xff]
        %v401 = vld [vmem:[%s2 + $0x28] sm:$0xff]
        %v403 = vsel %vm258, %v388, 0
        %v406 = vsel %vm258, %v389, 0
        %v409 = vsel %vm258, %v390, 0
        %v412 = vsel %vm258, %v391, 0
        %v415 = vsel %vm258, %v392, 0
        %v418 = vsel %vm258, %v393, 0
        %v421 = vsel %vm258, %v394, 0
        %v424 = vsel %vm258, %v395, 0
        %426 = vmatprep.subr.mxu0 0.0
        %427 = vmatpush1.msra.mxu0 %v396
        %428 = vmatprep.subr.mxu0 0.0
        %429 = vmatpush1.msra.mxu0 %v397
        %430 = vmatprep.subr.mxu0 0.0
        %431 = vmatpush1.msra.mxu0 %v398
        %432 = vmatprep.subr.mxu0 0.0
        %433 = vmatpush1.msra.mxu0 %v399
        %434 = vmatprep.subr.mxu0 0.0
        %435 = vmatpush1.msra.mxu0 %v400
        %436 = vmatprep.subr.mxu0 0.0
        %437 = vmatpush1.msra.mxu0 %v401
        %438 = vmatprep.subr.mxu0 0.0
        %439 = vmatpush1.msra.mxu0 0.0
        %440 = vmatprep.subr.mxu0 0.0
        %441 = vmatpush1.msra.mxu0 0.0
        %442 = vmatprep.subr.mxu0 0.0
        %443 = vmatpush1.msra.mxu0 0.0
        %444 = vmatprep.subr.mxu0 0.0
        %445 = vmatpush1.msra.mxu0 0.0
        %446 = vmatprep.subr.mxu0 0.0
        %447 = vmatpush1.msra.mxu0 0.0
        %448 = vmatprep.subr.mxu0 0.0
        %449 = vmatpush1.msra.mxu0 0.0
        %450 = vmatprep.subr.mxu0 0.0
        %451 = vmatpush1.msra.mxu0 0.0
        %452 = vmatprep.subr.mxu0 0.0
        %453 = vmatpush1.msra.mxu0 0.0
        %454 = vmatprep.subr.mxu0 0.0
        %455 = vmatpush1.msra.mxu0 0.0
        %456 = vmatprep.subr.mxu0 0.0
        %457 = vmatpush1.msra.mxu0 0.0
        %458 = vmatprep.subr.mxu0 0.0
        %459 = vmatpush1.msra.mxu0 0.0
        %460 = vmatprep.subr.mxu0 0.0
        %461 = vmatpush1.msra.mxu0 0.0
        %462 = vmatprep.subr.mxu0 0.0
        %463 = vmatpush1.msra.mxu0 0.0
        %464 = vmatprep.subr.mxu0 0.0
        %465 = vmatpush1.msra.mxu0 0.0
        %466 = vmatprep.subr.mxu0 0.0
        %467 = vmatpush1.msra.mxu0 0.0
        %468 = vmatprep.subr.mxu0 0.0
        %469 = vmatpush1.msra.mxu0 0.0
        %470 = vmatprep.subr.mxu0 0.0
        %471 = vmatpush1.msra.mxu0 0.0
        %472 = vmatprep.subr.mxu0 0.0
        %473 = vmatpush1.msra.mxu0 0.0
        %474 = vmatprep.subr.mxu0 0.0
        %475 = vmatpush1.msra.mxu0 0.0
        %476 = vmatprep.subr.mxu0 0.0
        %477 = vmatpush1.msra.mxu0 0.0
        %478 = vmatprep.subr.mxu0 0.0
        %479 = vmatpush1.msra.mxu0 0.0
        %480 = vmatprep.subr.mxu0 0.0
        %481 = vmatpush1.msra.mxu0 0.0
        %482 = vmatprep.subr.mxu0 0.0
        %483 = vmatpush1.msra.mxu0 0.0
        %484 = vmatprep.subr.mxu0 0.0
        %485 = vmatpush1.msra.mxu0 0.0
        %486 = vmatprep.subr.mxu0 0.0
        %487 = vmatpush1.msra.mxu0 0.0
        %488 = vmatprep.subr.mxu0 0.0
        %489 = vmatpush1.msra.mxu0 0.0
        %490 = vmatprep.mubr.f32.mxu0 0.0
        %491 = vmatmul.mubr.f32.gmra.mrb[0].mxu0 %v403
        %v492 = vpop.f32.mrb[0].mxu0
        %v493 = vadd.f32 0.0, %v492
        %v494 = vpop.f32.mrb[0].mxu0
        %495 = vmatprep.mubr.f32.mxu0 0.0
        %496 = vmatmul.mubr.f32.gmra.mrb[0].mxu0 %v406
        %v497 = vpop.f32.mrb[0].mxu0
        %v498 = vadd.f32 0.0, %v497
        %v499 = vpop.f32.mrb[0].mxu0
        %500 = vmatprep.mubr.f32.mxu0 0.0
        %501 = vmatmul.mubr.f32.gmra.mrb[0].mxu0 %v409
        %v502 = vpop.f32.mrb[0].mxu0
        %v503 = vadd.f32 0.0, %v502
        %v504 = vpop.f32.mrb[0].mxu0
        %505 = vmatprep.mubr.f32.mxu0 0.0
        %506 = vmatmul.mubr.f32.gmra.mrb[0].mxu0 %v412
        %v507 = vpop.f32.mrb[0].mxu0
        %v508 = vadd.f32 0.0, %v507
        %v509 = vpop.f32.mrb[0].mxu0
        %510 = vmatprep.mubr.f32.mxu0 0.0
        %511 = vmatmul.mubr.f32.gmra.mrb[0].mxu0 %v415
        %v512 = vpop.f32.mrb[0].mxu0
        %v513 = vadd.f32 0.0, %v512
        %v514 = vpop.f32.mrb[0].mxu0
        %515 = vmatprep.mubr.f32.mxu0 0.0
        %516 = vmatmul.mubr.f32.gmra.mrb[0].mxu0 %v418
        %v517 = vpop.f32.mrb[0].mxu0
        %v518 = vadd.f32 0.0, %v517
        %v519 = vpop.f32.mrb[0].mxu0
        %520 = vmatprep.mubr.f32.mxu0 0.0
        %521 = vmatmul.mubr.f32.gmra.mrb[0].mxu0 %v421
        %v522 = vpop.f32.mrb[0].mxu0
        %v523 = vadd.f32 0.0, %v522
        %v524 = vpop.f32.mrb[0].mxu0
        %525 = vmatprep.mubr.f32.mxu0 0.0
        %526 = vmatmul.mubr.f32.gmra.mrb[0].mxu0 %v424
        %v527 = vpop.f32.mrb[0].mxu0
        %v528 = vadd.f32 0.0, %v527
        %v529 = vpop.f32.mrb[0].mxu0
        %530 = vdwg.mxu0
        %531 = vst [vmem:[%s180] sm:$0xff] %v493
        %532 = vst [vmem:[%s180 + $0x8] sm:$0xff] %v498
        %533 = vst [vmem:[%s180 + $0x10] sm:$0xff] %v503
        %534 = vst [vmem:[%s180 + $0x18] sm:$0xff] %v508
        %535 = vst [vmem:[%s180 + $0x20] sm:$0xff] %v513
        %536 = vst [vmem:[%s180 + $0x28] sm:$0xff] %v518
        %537 = vst [vmem:[%s180 + $0x30] sm:$0xff] %v523
        %538 = vst [vmem:[%s180 + $0x38] sm:$0xff] %v528
        %s539 = sand.u32 %s98, 1
        %s540 = scalar_lea.sflag [#allocation3], %s539
        %s541 = sand.u32 %s98, 1
        %s542 = smul.addr %s541, 64
        %s543 = scalar_lea.vmem [#allocation2], %s542
        // Predicated region
        $region33: #{tpu_custom_call.1} parent=31 // pred_check
          %p544 = pneg %p108
        $region34: #{tpu_custom_call.1} parent=31 // pred_check_branch
          %546 = sbr.rel (%p544) target = $region36
        $region35: #{tpu_custom_call.1} parent=31 // pred_region
          %s547 = smul.u32 8, %s17
          %s549 = ssub.s32 1024, 1024
          %550 = vsyncadd %s540, %s549
          %s551 = smul.addr %s547, 128
          %s552 = scalar_lea.hbm %s3, %s551
          %s553 = sshll.u32 %s543, 4
          %s554 = int_to_ptr.vmem [resolvable:$true] %s553
          %559 = dma.vmem_to_hbm [thread:$0]  %s554, 1024, %s552, %s540, 128, 128, 8
        $region36: #{tpu_custom_call.1} parent=31 // pred_fallthru
          _
      $region32: #{tpu_custom_call.1} parent=5 // pred_fallthru
        _
      %p560 = scmp.le.s32.totalorder 2, %s12
      // Predicated region
      $region37: #{tpu_custom_call.1} parent=5 // pred_check
        %p561 = pneg %p560
      $region38: #{tpu_custom_call.1} parent=5 // pred_check_branch
        %563 = sbr.rel (%p561) target = $region40
      $region39: #{tpu_custom_call.1} parent=5 // pred_region
        %s564 = ssub.s32 %s12, 2
        // Predicated region
        $region41: #{tpu_custom_call.1} parent=39 // pred_check
          %p565 = pneg %p114
        $region42: #{tpu_custom_call.1} parent=39 // pred_check_branch
          %567 = sbr.rel (%p565) target = $region44
        $region43: #{tpu_custom_call.1} parent=39 // pred_region
          %s568 = sand.u32 %s99, 1
          %s569 = scalar_lea.sflag [#allocation3], %s568
          %s570 = sand.u32 %s99, 1
          %s571 = smul.addr %s570, 64
          %s572 = scalar_lea.vmem [#allocation2], %s571
          %573 = dma.done %s569, 1024
        $region44: #{tpu_custom_call.1} parent=39 // pred_fallthru
          _
      $region40: #{tpu_custom_call.1} parent=5 // pred_fallthru
        _
    $region6: #{tpu_custom_call.1} parent=1 // loop_footer
      %s16 = sadd.s32 1, %s12
    $region7: #{tpu_custom_call.1} parent=1 // loop_footer_branch
      %11 = sbr.rel target = $region3
    $region8: #{tpu_custom_call.1} parent=1 // loop_exit
      _
    %574 = vsyncpa [#allocation3], 1
    %s575 = scalar_lea.sflag [#allocation3], 1
    %576 = vsyncpa %s575, 1

</llo_original>
